<compile_context>
chip_gen: v6e
topology: v6e:2x2x1
jax: 0.10.0
libtpu: 0.0.40
codegen_flags: <defaults>
</compile_context>

<pallas_src>
import functools

import jax
import jax.numpy as jnp
from jax.experimental import pallas as pl
from jax.experimental.pallas import tpu as pltpu


def _noise_analysis_kernel(w_ref, b_ref, x_ref, o_ref, *, H, W):
    # w_ref, b_ref : (1, C, 1) f32 in VMEM (row-sums of the 1x1 weight, bias)
    # x_ref, o_ref : (Nb, C, H*W)          (flat spatial = lane dimension)
    x = x_ref[...]                                     # (Nb, C, HW)
    Nb, C, HW = x.shape

    # Every output channel of the fixed high-pass conv sees the same cross filter
    # applied to sum_c x[c]  -> single sublane reduction.
    s = jnp.sum(x, axis=1, keepdims=True)              # (Nb, 1, HW)

    idx = jax.lax.broadcasted_iota(jnp.int32, (Nb, 1, HW), 2)
    col = idx % W                                      # column within the (H, W) image

    # Zero-padded 2-D neighbors expressed as lane rolls of the flat layout:
    #   up    = s[h-1, w] -> flat i - W      down  = s[h+1, w] -> flat i + W
    #   left  = s[h, w-1] -> flat i - 1      right = s[h, w+1] -> flat i + 1
    up = jnp.where(idx >= W, pltpu.roll(s, W, axis=2), 0.0)
    down = jnp.where(idx < (H - 1) * W, pltpu.roll(s, HW - W, axis=2), 0.0)
    left = jnp.where(col != 0, pltpu.roll(s, 1, axis=2), 0.0)
    right = jnp.where(col != W - 1, pltpu.roll(s, HW - 1, axis=2), 0.0)

    abs_hp = jnp.abs(s - 0.25 * (up + down + left + right))   # (Nb, 1, HW)

    # 1x1 conv of the channel-broadcast |hp| == per-channel scale + bias (exact).
    # (1,C,1) * (Nb,1,HW) broadcasts in-register; single unmasked full-tile store.
    o_ref[...] = (x + w_ref[...] * abs_hp + b_ref[...]).astype(o_ref.dtype)


def _choose_batch_block(N, sample_bytes, block_budget_bytes):
    """Largest per-step batch block within the VMEM budget (divisor of N)."""
    nb_cap = max(1, min(N, block_budget_bytes // max(sample_bytes, 1)))
    # Keep >= 2 grid steps (v7x has 2 TensorCores) when there is enough work for the
    # split to be worthwhile; tiny problems stay in one grid step.
    if nb_cap >= N and N > 1 and N * sample_bytes > (1 << 20):
        nb_cap = max(1, -(-N // 2))
    for nb in range(min(nb_cap, N), 0, -1):
        if N % nb == 0:
            return nb
    return 1


def noise_analysis(x, w1x1, bias, *,
                   block_budget_bytes=2 << 20,
                   vmem_limit_bytes=32 << 20):
    """x: (N, C, H, W) f32; w1x1: (C, C) or (C, C, 1, 1) f32; bias: (C,) f32."""
    N, C, H, W = x.shape
    HW = H * W

    # The high-pass output is identical across channels, so the 1x1 conv collapses to a
    # per-output-channel scale by the row-sum of its weights (exact, not an approximation).
    w_rowsum = jnp.sum(w1x1.reshape(C, C), axis=1).astype(jnp.float32).reshape(1, C, 1)
    bias_r = bias.reshape(1, C, 1).astype(jnp.float32)

    x_flat = x.reshape(N, C, HW)                      # free bitcast; HW = lane dim

    sample_bytes = C * HW * x.dtype.itemsize
    nb = _choose_batch_block(N, sample_bytes, block_budget_bytes)
    grid = (N // nb,)

    kernel = functools.partial(_noise_analysis_kernel, H=H, W=W)

    cost = pl.CostEstimate(
        flops=10 * N * C * HW,
        transcendentals=0,
        bytes_accessed=2 * N * C * HW * x.dtype.itemsize + 8 * C,
    )

    out_flat = pl.pallas_call(
        kernel,
        out_shape=jax.ShapeDtypeStruct((N, C, HW), x.dtype),
        grid_spec=pltpu.PrefetchScalarGridSpec(
            num_scalar_prefetch=0,
            grid=grid,
            in_specs=[
                pl.BlockSpec((1, C, 1), lambda n: (0, 0, 0)),     # rowsum(W1x1)
                pl.BlockSpec((1, C, 1), lambda n: (0, 0, 0)),     # bias
                pl.BlockSpec((nb, C, HW), lambda n: (n, 0, 0)),   # x block
            ],
            out_specs=pl.BlockSpec((nb, C, HW), lambda n: (n, 0, 0)),
        ),
        compiler_params=pltpu.CompilerParams(
            dimension_semantics=("parallel",),
            vmem_limit_bytes=vmem_limit_bytes,
        ),
        cost_estimate=cost,
        # NOTE: pass input_output_aliases={2: 0} when the caller no longer needs x
        # (halves peak HBM footprint); not done here because the demo reuses x below.
    )(w_rowsum, bias_r, x_flat)

    return out_flat.reshape(N, C, H, W)


def noise_analysis_ref(x, w1x1, bias):
    """Pure-JAX reference matching the PyTorch module semantics (NCHW)."""
    s = x.sum(axis=1)                                 # (N, H, W)
    p = jnp.pad(s, ((0, 0), (1, 1), (1, 1)))
    hp = s - 0.25 * (p[:, :-2, 1:-1] + p[:, 2:, 1:-1] + p[:, 1:-1, :-2] + p[:, 1:-1, 2:])
    abs_noise = jnp.broadcast_to(jnp.abs(hp)[:, None, :, :], x.shape)      # (N, C, H, W)
    proc = jnp.einsum("oc,nchw->nohw", w1x1, abs_noise) + bias[None, :, None, None]
    return x + proc


if __name__ == "__main__":
    N, C, H, W = 2, 4, 16, 16
    key = jax.random.PRNGKey(0)
    kx, kw, kb = jax.random.split(key, 3)

    x = jax.random.normal(kx, (N, C, H, W), dtype=jnp.float32)

    # noise_processor = nn.Conv2d(C, C, kernel_size=1): PyTorch-style uniform init.
    bound = 1.0 / jnp.sqrt(jnp.float32(C))
    w1x1 = jax.random.uniform(kw, (C, C), dtype=jnp.float32, minval=-bound, maxval=bound)
    bias = jax.random.uniform(kb, (C,), dtype=jnp.float32, minval=-bound, maxval=bound)

    out = noise_analysis(x, w1x1, bias)
    out = jax.block_until_ready(out)

    ref = noise_analysis_ref(x, w1x1, bias)
    assert out.shape == (N, C, H, W)
    assert jnp.allclose(out, ref, atol=1e-5, rtol=1e-5), "mismatch vs reference"

    print("KERNEL_OK")
</pallas_src>

<mosaic_0001>
module attributes {stable_mosaic.version = 11 : i64} {
  func.func @_noise_analysis_kernel(%arg0: i32, %arg1: memref<1x4x1xf32, #tpu.memory_space<vmem>>, %arg2: memref<1x4x1xf32, #tpu.memory_space<vmem>>, %arg3: memref<2x4x256xf32, #tpu.memory_space<vmem>>, %arg4: memref<2x4x256xf32, #tpu.memory_space<vmem>>) attributes {dimension_semantics = [#tpu.dimension_semantics<parallel>], iteration_bounds = array<i64: 1>, scalar_prefetch = 0 : i64, scratch_operands = 0 : i64, tpu.core_type = #tpu.core_type<tc>, window_params = [{pipeline_mode = #tpu.pipeline_mode<synchronous>, transform_indices = @transform_0, window_bounds = array<i64: 1, 4, 1>}, {pipeline_mode = #tpu.pipeline_mode<synchronous>, transform_indices = @transform_1, window_bounds = array<i64: 1, 4, 1>}, {transform_indices = @transform_2, window_bounds = array<i64: 2, 4, 256>}, {transform_indices = @transform_3, window_bounds = array<i64: 2, 4, 256>}]} {
    %c0 = arith.constant 0 : index
    %c0_0 = arith.constant 0 : index
    %c0_1 = arith.constant 0 : index
    %0 = vector.load %arg3[%c0, %c0_0, %c0_1] : memref<2x4x256xf32, #tpu.memory_space<vmem>>, vector<2x4x256xf32>
    %cst = arith.constant dense<0.000000e+00> : vector<2x256xf32>
    %1 = vector.multi_reduction <add>, %0, %cst [1] : vector<2x4x256xf32> to vector<2x256xf32>
    %2 = vector.shape_cast %1 : vector<2x256xf32> to vector<2x1x256xf32>
    %3 = tpu.iota {dimensions = array<i32: 2>} : vector<2x1x256xi32>
    %c16_i32 = arith.constant 16 : i32
    %c0_i32 = arith.constant 0 : i32
    %4 = arith.cmpi eq, %c16_i32, %c0_i32 : i32
    %c1_i32 = arith.constant 1 : i32
    %5 = arith.select %4, %c1_i32, %c16_i32 : i32
    %6 = vector.broadcast %5 : i32 to vector<2x1x256xi32>
    %7 = arith.remsi %3, %6 : vector<2x1x256xi32>
    %c0_i32_2 = arith.constant 0 : i32
    %8 = vector.broadcast %c0_i32_2 : i32 to vector<2x1x256xi32>
    %9 = arith.cmpi ne, %7, %8 : vector<2x1x256xi32>
    %c0_i32_3 = arith.constant 0 : i32
    %10 = vector.broadcast %c0_i32_3 : i32 to vector<2x1x256xi32>
    %11 = arith.cmpi slt, %7, %10 : vector<2x1x256xi32>
    %c0_i32_4 = arith.constant 0 : i32
    %12 = arith.cmpi slt, %5, %c0_i32_4 : i32
    %13 = vector.broadcast %12 : i1 to vector<2x1x256xi1>
    %14 = vector.broadcast %13 : vector<2x1x256xi1> to vector<2x1x256xi1>
    %15 = arith.xori %11, %14 : vector<2x1x256xi1>
    %16 = arith.andi %15, %9 : vector<2x1x256xi1>
    %17 = vector.broadcast %5 : i32 to vector<2x1x256xi32>
    %18 = arith.addi %7, %17 : vector<2x1x256xi32>
    %19 = arith.select %16, %18, %7 : vector<2x1x256xi1>, vector<2x1x256xi32>
    %c16_i32_5 = arith.constant 16 : i32
    %20 = vector.broadcast %c16_i32_5 : i32 to vector<2x1x256xi32>
    %21 = arith.cmpi sge, %3, %20 : vector<2x1x256xi32>
    %c16_i32_6 = arith.constant 16 : i32
    %22 = tpu.dynamic_rotate %2 by %c16_i32_6 dim 2 : vector<2x1x256xf32>, i32 -> vector<2x1x256xf32>
    %cst_7 = arith.constant 0.000000e+00 : f32
    %23 = vector.broadcast %cst_7 : f32 to vector<2x1x256xf32>
    %24 = arith.select %21, %22, %23 : vector<2x1x256xi1>, vector<2x1x256xf32>
    %c240_i32 = arith.constant 240 : i32
    %25 = vector.broadcast %c240_i32 : i32 to vector<2x1x256xi32>
    %26 = arith.cmpi slt, %3, %25 : vector<2x1x256xi32>
    %c240_i32_8 = arith.constant 240 : i32
    %27 = tpu.dynamic_rotate %2 by %c240_i32_8 dim 2 : vector<2x1x256xf32>, i32 -> vector<2x1x256xf32>
    %cst_9 = arith.constant 0.000000e+00 : f32
    %28 = vector.broadcast %cst_9 : f32 to vector<2x1x256xf32>
    %29 = arith.select %26, %27, %28 : vector<2x1x256xi1>, vector<2x1x256xf32>
    %c0_i32_10 = arith.constant 0 : i32
    %30 = vector.broadcast %c0_i32_10 : i32 to vector<2x1x256xi32>
    %31 = arith.cmpi ne, %19, %30 : vector<2x1x256xi32>
    %c1_i32_11 = arith.constant 1 : i32
    %32 = tpu.dynamic_rotate %2 by %c1_i32_11 dim 2 : vector<2x1x256xf32>, i32 -> vector<2x1x256xf32>
    %cst_12 = arith.constant 0.000000e+00 : f32
    %33 = vector.broadcast %cst_12 : f32 to vector<2x1x256xf32>
    %34 = arith.select %31, %32, %33 : vector<2x1x256xi1>, vector<2x1x256xf32>
    %c15_i32 = arith.constant 15 : i32
    %35 = vector.broadcast %c15_i32 : i32 to vector<2x1x256xi32>
    %36 = arith.cmpi ne, %19, %35 : vector<2x1x256xi32>
    %c255_i32 = arith.constant 255 : i32
    %37 = tpu.dynamic_rotate %2 by %c255_i32 dim 2 : vector<2x1x256xf32>, i32 -> vector<2x1x256xf32>
    %cst_13 = arith.constant 0.000000e+00 : f32
    %38 = vector.broadcast %cst_13 : f32 to vector<2x1x256xf32>
    %39 = arith.select %36, %37, %38 : vector<2x1x256xi1>, vector<2x1x256xf32>
    %40 = arith.addf %24, %29 : vector<2x1x256xf32>
    %41 = arith.addf %40, %34 : vector<2x1x256xf32>
    %42 = arith.addf %41, %39 : vector<2x1x256xf32>
    %cst_14 = arith.constant 2.500000e-01 : f32
    %43 = vector.broadcast %cst_14 : f32 to vector<2x1x256xf32>
    %44 = arith.mulf %43, %42 : vector<2x1x256xf32>
    %45 = arith.subf %2, %44 : vector<2x1x256xf32>
    %46 = math.absf %45 : vector<2x1x256xf32>
    %c0_15 = arith.constant 0 : index
    %c0_16 = arith.constant 0 : index
    %c0_17 = arith.constant 0 : index
    %47 = vector.load %arg1[%c0_15, %c0_16, %c0_17] : memref<1x4x1xf32, #tpu.memory_space<vmem>>, vector<1x4x1xf32>
    %48 = vector.broadcast %47 : vector<1x4x1xf32> to vector<2x4x256xf32>
    %49 = vector.broadcast %46 : vector<2x1x256xf32> to vector<2x4x256xf32>
    %50 = arith.mulf %48, %49 : vector<2x4x256xf32>
    %51 = arith.addf %0, %50 : vector<2x4x256xf32>
    %c0_18 = arith.constant 0 : index
    %c0_19 = arith.constant 0 : index
    %c0_20 = arith.constant 0 : index
    %52 = vector.load %arg2[%c0_18, %c0_19, %c0_20] : memref<1x4x1xf32, #tpu.memory_space<vmem>>, vector<1x4x1xf32>
    %53 = vector.broadcast %52 : vector<1x4x1xf32> to vector<2x4x256xf32>
    %54 = arith.addf %51, %53 : vector<2x4x256xf32>
    %c0_21 = arith.constant 0 : index
    %c0_22 = arith.constant 0 : index
    %c0_23 = arith.constant 0 : index
    %55 = vector.load %arg4[%c0_21, %c0_22, %c0_23] : memref<2x4x256xf32, #tpu.memory_space<vmem>>, vector<2x4x256xf32>
    tpu.vector_store %arg4[%c0_21, %c0_22, %c0_23], %54 {strides = array<i32>} : memref<2x4x256xf32, #tpu.memory_space<vmem>>, vector<2x4x256xf32>,
    return
  }
  func.func @transform_0(%arg0: i32) -> (i32, i32, i32) {
    %c0_i32 = arith.constant 0 : i32
    %c0_i32_0 = arith.constant 0 : i32
    %c0_i32_1 = arith.constant 0 : i32
    %c0_i32_2 = arith.constant 0 : i32
    return %c0_i32, %c0_i32_0, %c0_i32_1 : i32, i32, i32
  }
  func.func @transform_1(%arg0: i32) -> (i32, i32, i32) {
    %c0_i32 = arith.constant 0 : i32
    %c0_i32_0 = arith.constant 0 : i32
    %c0_i32_1 = arith.constant 0 : i32
    %c0_i32_2 = arith.constant 0 : i32
    return %c0_i32, %c0_i32_0, %c0_i32_1 : i32, i32, i32
  }
  func.func @transform_2(%arg0: i32) -> (i32, i32, i32) {
    %c0_i32 = arith.constant 0 : i32
    %c0_i32_0 = arith.constant 0 : i32
    %c0_i32_1 = arith.constant 0 : i32
    return %arg0, %c0_i32, %c0_i32_0 : i32, i32, i32
  }
  func.func @transform_3(%arg0: i32) -> (i32, i32, i32) {
    %c0_i32 = arith.constant 0 : i32
    %c0_i32_0 = arith.constant 0 : i32
    %c0_i32_1 = arith.constant 0 : i32
    return %arg0, %c0_i32, %c0_i32_0 : i32, i32, i32
  }
}

</mosaic_0001>

<llo_original>
// kernel: tpu_custom_call.1
$region0: #{tpu_custom_call.1}
  #allocation0 [shape = 'u32[]', space=smem, size = 0x4, offset = 0x4, fixed_abs, tag = 'smem constant byte address 0x4 - core index']
  #allocation1 [shape = 'u32[144,128]{1,0:T(1,128)}', space=vmem, size = 0x12000, scoped, tag = 'internal scratch']
  %s0 = inlined_call_operand.vmem [shape: f32[1,4,1], index: 0, kind: input, shape index: {}]
  %s1 = inlined_call_operand.vmem [shape: f32[1,4,1], index: 1, kind: input, shape index: {}]
  %s2 = inlined_call_operand.hbm [shape: f32[2,4,256], index: 2, kind: input, shape index: {}]
  %s3 = inlined_call_operand.hbm [shape: f32[2,4,256], index: 3, kind: output, shape index: {}]
  %s4 = sld [smem:[#allocation0]]
  $region26: #{tpu_custom_call.1} parent=0
    _
  %s6 = ssub.s32 1, %s4
  %s7 = scalar_select 0, %s6, %s4
  $region1: #{tpu_custom_call.1} parent=0
    #allocation2 [shape = 'u8[8192]{0}', space=vmem, size = 0x2000, scoped, tag = 'input window, operand 2, single buffered']
    #allocation3 [shape = 's32[1]{0}', space=sflag, size = 0x4, scoped, tag = 'scoped memory for tpu_custom_call.1']
    #allocation4 [shape = 's32[1]{0}', space=sflag, size = 0x4, scoped, tag = 'scoped memory for tpu_custom_call.1']
    #allocation5 [shape = 'u8[8192]{0}', space=vmem, size = 0x2000, scoped, tag = 'output window, operand 0, single buffered']
    %8 = vsyncpa [#allocation3], 0
    %9 = vsyncpa [#allocation4], 0
    // Predicated region
    $region2: #{tpu_custom_call.1} parent=1 // pred_check
      _
    $region3: #{tpu_custom_call.1} parent=1 // pred_check_branch
      %11 = sbr.rel (0) target = $region5
    $region4: #{tpu_custom_call.1} parent=1 // pred_region
      _
    $region5: #{tpu_custom_call.1} parent=1 // pred_fallthru
      _
    // Predicated region
    $region6: #{tpu_custom_call.1} parent=1 // pred_check
      _
    $region7: #{tpu_custom_call.1} parent=1 // pred_check_branch
      %13 = sbr.rel (0) target = $region9
    $region8: #{tpu_custom_call.1} parent=1 // pred_region
      _
    $region9: #{tpu_custom_call.1} parent=1 // pred_fallthru
      _
    // Predicated region
    $region10: #{tpu_custom_call.1} parent=1 // pred_check
      _
    $region11: #{tpu_custom_call.1} parent=1 // pred_check_branch
      %15 = sbr.rel (0) target = $region13
    $region12: #{tpu_custom_call.1} parent=1 // pred_region
      %s17 = ssub.s32 256, 256
      %18 = vsyncadd [#allocation3], %s17
      %s19 = sshll.u32 [#allocation2], 4
      %s20 = int_to_ptr.vmem [resolvable:$true] %s19
      %25 = dma.hbm_to_vmem [thread:$0]  %s2, 256, %s20, [#allocation3], 128, 128, 8
    $region13: #{tpu_custom_call.1} parent=1 // pred_fallthru
      _
    // Predicated region
    $region14: #{tpu_custom_call.1} parent=1 // pred_check
      _
    $region15: #{tpu_custom_call.1} parent=1 // pred_check_branch
      %27 = sbr.rel (0) target = $region17
    $region16: #{tpu_custom_call.1} parent=1 // pred_region
      %28 = dma.done [#allocation3], 256
    $region17: #{tpu_custom_call.1} parent=1 // pred_fallthru
      _
    %v29 = vld [vmem:[#allocation2] sm:$0xff]
    %v30 = vld [vmem:[#allocation2 + $0x8] sm:$0xff]
    %v33 = vcombine.high %v29, %v29
    %v34 = vcombine.high %v30, %v30
    %vm37 = vcmask 1043456
    %v38 = vsel %vm37, %v29, 0.0
    %v39 = vrot.slane %v38, 4
    %v40 = vadd.f32 %v38, %v39
    %v41 = vrot.slane %v40, 2
    %v42 = vadd.f32 %v40, %v41
    %v43 = vrot.slane %v42, 1
    %v44 = vadd.f32 %v42, %v43
    %v45 = vsel %vm37, %v33, 0.0
    %v46 = vrot.slane %v45, 4
    %v47 = vadd.f32 %v45, %v46
    %v48 = vrot.slane %v47, 2
    %v49 = vadd.f32 %v47, %v48
    %v50 = vrot.slane %v49, 1
    %v51 = vadd.f32 %v49, %v50
    %v52 = vsel %vm37, %v30, 0.0
    %v53 = vrot.slane %v52, 4
    %v54 = vadd.f32 %v52, %v53
    %v55 = vrot.slane %v54, 2
    %v56 = vadd.f32 %v54, %v55
    %v57 = vrot.slane %v56, 1
    %v58 = vadd.f32 %v56, %v57
    %v59 = vsel %vm37, %v34, 0.0
    %v60 = vrot.slane %v59, 4
    %v61 = vadd.f32 %v59, %v60
    %v62 = vrot.slane %v61, 2
    %v63 = vadd.f32 %v61, %v62
    %v64 = vrot.slane %v63, 1
    %v65 = vadd.f32 %v63, %v64
    %v66 = vlaneseq
    %v67 = vand.u32 %v66, 127
    %v68 = vadd.s32 %v67, 128
    %vm69 = vcmp.lt.s32.totalorder %v67, 0
    %v70 = vsub.s32 0, %v67
    %v71 = vsel %vm69, %v70, %v67
    %v72 = vshrl.u32 %v71, 4
    %v73 = vand.u32 %v71, 15
    %v74 = vsub.s32 0, %v73
    %v75 = vsel %vm69, %v74, %v73
    %vm76 = vcmp.lt.s32.totalorder %v68, 0
    %v77 = vsub.s32 0, %v68
    %v78 = vsel %vm76, %v77, %v68
    %v79 = vshrl.u32 %v78, 4
    %v80 = vand.u32 %v78, 15
    %v81 = vsub.s32 0, %v80
    %v82 = vsel %vm76, %v81, %v80
    %vm83 = vcmp.ne.s32.totalorder %v75, 0
    %vm84 = vcmp.ne.s32.totalorder %v82, 0
    %vm85 = vcmp.lt.s32.totalorder %v75, 0
    %vm86 = vcmp.lt.s32.totalorder %v82, 0
    %vm87 = vmand %vm85, %vm83
    %vm88 = vmand %vm86, %vm84
    %v89 = vadd.s32 %v75, 16
    %v90 = vadd.s32 %v82, 16
    %v91 = vsel %vm87, %v89, %v75
    %v92 = vsel %vm88, %v90, %v82
    %vm93 = vcmp.ge.s32.totalorder %v67, 16
    %vm94 = vcmp.ge.s32.totalorder %v68, 16
    %95 = vrot.lane.b32.xlu0 %v44, 16
    %v96 = vpop.permute.xlu0 %95
    %97 = vrot.lane.b32.xlu0 %v58, 16
    %v98 = vpop.permute.xlu0 %97
    %99 = vrot.lane.b32.xlu0 %v51, 16
    %v100 = vpop.permute.xlu0 %99
    %101 = vrot.lane.b32.xlu0 %v65, 16
    %v102 = vpop.permute.xlu0 %101
    %vm103 = vcmp.lt.s32.totalorder %v67, 16
    %v104 = vsel %vm103, %v96, %v100
    %v105 = vsel %vm103, %v98, %v102
    %v106 = vsel %vm103, %v100, %v96
    %v107 = vsel %vm103, %v102, %v98
    %v108 = vsel %vm93, %v106, 0.0
    %v109 = vsel %vm94, %v104, 0.0
    %v110 = vsel %vm93, %v107, 0.0
    %v111 = vsel %vm94, %v105, 0.0
    %vm112 = vcmp.lt.s32.totalorder %v67, 240
    %vm113 = vcmp.lt.s32.totalorder %v68, 240
    %114 = vrot.lane.b32.xlu0 %v44, 112
    %v115 = vpop.permute.xlu0 %114
    %116 = vrot.lane.b32.xlu0 %v58, 112
    %v117 = vpop.permute.xlu0 %116
    %118 = vrot.lane.b32.xlu0 %v51, 112
    %v119 = vpop.permute.xlu0 %118
    %120 = vrot.lane.b32.xlu0 %v65, 112
    %v121 = vpop.permute.xlu0 %120
    %vm122 = vcmp.lt.s32.totalorder %v67, 112
    %v123 = vsel %vm122, %v115, %v119
    %v124 = vsel %vm122, %v117, %v121
    %v125 = vsel %vm122, %v119, %v115
    %v126 = vsel %vm122, %v121, %v117
    %v127 = vsel %vm112, %v123, 0.0
    %v128 = vsel %vm113, %v125, 0.0
    %v129 = vsel %vm112, %v124, 0.0
    %v130 = vsel %vm113, %v126, 0.0
    %vm131 = vcmp.ne.s32.totalorder %v91, 0
    %vm132 = vcmp.ne.s32.totalorder %v92, 0
    %133 = vrot.lane.b32.xlu0 %v44, 1
    %v134 = vpop.permute.xlu0 %133
    %135 = vrot.lane.b32.xlu0 %v58, 1
    %v136 = vpop.permute.xlu0 %135
    %137 = vrot.lane.b32.xlu0 %v51, 1
    %v138 = vpop.permute.xlu0 %137
    %139 = vrot.lane.b32.xlu0 %v65, 1
    %v140 = vpop.permute.xlu0 %139
    %vm141 = vcmp.lt.s32.totalorder %v67, 1
    %v142 = vsel %vm141, %v134, %v138
    %v143 = vsel %vm141, %v136, %v140
    %v144 = vsel %vm141, %v138, %v134
    %v145 = vsel %vm141, %v140, %v136
    %v146 = vsel %vm131, %v144, 0.0
    %v147 = vsel %vm132, %v142, 0.0
    %v148 = vsel %vm131, %v145, 0.0
    %v149 = vsel %vm132, %v143, 0.0
    %vm150 = vcmp.ne.s32.totalorder %v91, 15
    %vm151 = vcmp.ne.s32.totalorder %v92, 15
    %152 = vrot.lane.b32.xlu0 %v44, 127
    %v153 = vpop.permute.xlu0 %152
    %154 = vrot.lane.b32.xlu0 %v58, 127
    %v155 = vpop.permute.xlu0 %154
    %156 = vrot.lane.b32.xlu0 %v51, 127
    %v157 = vpop.permute.xlu0 %156
    %158 = vrot.lane.b32.xlu0 %v65, 127
    %v159 = vpop.permute.xlu0 %158
    %vm160 = vcmp.lt.s32.totalorder %v67, 127
    %v161 = vsel %vm160, %v153, %v157
    %v162 = vsel %vm160, %v155, %v159
    %v163 = vsel %vm160, %v157, %v153
    %v164 = vsel %vm160, %v159, %v155
    %v165 = vsel %vm150, %v161, 0.0
    %v166 = vsel %vm151, %v163, 0.0
    %v167 = vsel %vm150, %v162, 0.0
    %v168 = vsel %vm151, %v164, 0.0
    %v169 = vadd.f32 %v108, %v127
    %v170 = vadd.f32 %v109, %v128
    %v171 = vadd.f32 %v110, %v129
    %v172 = vadd.f32 %v111, %v130
    %v173 = vadd.f32 %v169, %v146
    %v174 = vadd.f32 %v170, %v147
    %v175 = vadd.f32 %v171, %v148
    %v176 = vadd.f32 %v172, %v149
    %v177 = vadd.f32 %v173, %v165
    %v178 = vadd.f32 %v174, %v166
    %v179 = vadd.f32 %v175, %v167
    %v180 = vadd.f32 %v176, %v168
    %v181 = vmul.f32 %v177, 0.25
    %v182 = vmul.f32 %v178, 0.25
    %v183 = vmul.f32 %v179, 0.25
    %v184 = vmul.f32 %v180, 0.25
    %v185 = vsub.f32 %v44, %v181
    %v186 = vsub.f32 %v51, %v182
    %v187 = vsub.f32 %v58, %v183
    %v188 = vsub.f32 %v65, %v184
    %v189 = vand.u32 2147483647, %v185
    %v190 = vand.u32 2147483647, %v186
    %v191 = vand.u32 2147483647, %v187
    %v192 = vand.u32 2147483647, %v188
    %v193 = vld [vmem:[%s0] sm:$0xf]
    %195 = vset.pattern.permute.xlu0 0
    %196 = vperm.xlu0 %195, %v193
    %v197 = vpop.permute.xlu0 %196
    %v199 = vlaneseq
    %v200 = vshrl.u32 %v199, 7
    %v201 = vsub.s32 0, %v200
    %v202 = vrot.slane %v189, %v201
    %v203 = vlaneseq
    %v204 = vshrl.u32 %v203, 7
    %v205 = vsub.s32 0, %v204
    %v206 = vrot.slane %v190, %v205
    %v207 = vlaneseq
    %v208 = vshrl.u32 %v207, 7
    %v209 = vsub.s32 0, %v208
    %v210 = vrot.slane %v191, %v209
    %v211 = vlaneseq
    %v212 = vshrl.u32 %v211, 7
    %v213 = vsub.s32 0, %v212
    %v214 = vrot.slane %v192, %v213
    %v215 = vmul.f32 %v197, %v202
    %v216 = vmul.f32 %v197, %v206
    %v217 = vmul.f32 %v197, %v210
    %v218 = vmul.f32 %v197, %v214
    %v223 = vcombine.low %v215, %v216
    %v224 = vcombine.low %v217, %v218
    %v227 = vadd.f32 %v29, %v223
    %v228 = vadd.f32 %v30, %v224
    %v229 = vld [vmem:[%s1] sm:$0xf]
    %231 = vset.pattern.permute.xlu0 0
    %232 = vperm.xlu0 %231, %v229
    %v233 = vpop.permute.xlu0 %232
    %v235 = vunpack.c.l.s4 839922192
    %v236 = vunpack.c.0.s8 %v235
    %v237 = vlaneseq
    %v238 = vshrl.u32 %v237, 7
    %v239 = vsub.s32 %v236, %v238
    %v240 = vrot.slane %v233, %v239
    %v242 = vadd.f32 %v227, %v240
    %v243 = vadd.f32 %v228, %v240
    %244 = vst [vmem:[#allocation5] sm:$0xff] %v242
    %245 = vst [vmem:[#allocation5 + $0x8] sm:$0xff] %v243
    // Predicated region
    $region18: #{tpu_custom_call.1} parent=1 // pred_check
      _
    $region19: #{tpu_custom_call.1} parent=1 // pred_check_branch
      %247 = sbr.rel (0) target = $region21
    $region20: #{tpu_custom_call.1} parent=1 // pred_region
      %s249 = ssub.s32 256, 256
      %250 = vsyncadd [#allocation4], %s249
      %s251 = sshll.u32 [#allocation5], 4
      %s252 = int_to_ptr.vmem [resolvable:$true] %s251
      %257 = dma.vmem_to_hbm [thread:$0]  %s252, 256, %s3, [#allocation4], 128, 128, 8
    $region21: #{tpu_custom_call.1} parent=1 // pred_fallthru
      _
    // Predicated region
    $region22: #{tpu_custom_call.1} parent=1 // pred_check
      _
    $region23: #{tpu_custom_call.1} parent=1 // pred_check_branch
      %259 = sbr.rel (0) target = $region25
    $region24: #{tpu_custom_call.1} parent=1 // pred_region
      %260 = dma.done [#allocation4], 256
    $region25: #{tpu_custom_call.1} parent=1 // pred_fallthru
      _
    %261 = vsyncpa [#allocation3], 1
    %262 = vsyncpa [#allocation4], 1

</llo_original>
